<compile_context>
chip_gen: v7x
topology: tpu7x:2x2x1
jax: 0.10.0
libtpu: 0.0.40
codegen_flags: <defaults>
</compile_context>

<pallas_src>
import functools

import jax
import jax.numpy as jnp
from jax.experimental import pallas as pl
from jax.experimental.pallas import tpu as pltpu


def _cdiv(a, b):
    return -(-a // b)


def _round_up(a, m):
    return _cdiv(a, m) * m


def _scale_kernel(scale_ref, x_ref, o_ref):
    # scale_ref: (1, 1) f32 scalar in SMEM; x_ref / o_ref: (tile_rows, lane) VMEM.
    # The kernel is HBM-DMA bound on every generation, so the body is kept to a
    # single vld + vmul + vst per vreg.  Multiply in f32, cast once to the
    # output dtype.  (Native-dtype multiply for bf16 would halve VPU work on
    # v6e/v7x but is wall-time neutral here and changes rounding; skipped.)
    o_ref[...] = (scale_ref[0, 0] * x_ref[...]).astype(o_ref.dtype)


@functools.lru_cache(maxsize=1)
def _vmem_budget():
    """Return (vmem_limit_bytes, default_target_block_bytes) for this chip."""
    vmem_cap = 64 << 20  # conservative fallback = v7x per-TC physical VMEM
    try:
        info = pltpu.get_tpu_info()
        vmem_cap = int(getattr(info, "vmem_capacity_bytes", vmem_cap))
    except Exception:
        pass  # interpret mode / older jax: keep the safe fallback
    # Footprint is ~4 * block (one input + one output, each double-buffered).
    # Never ask for more than half of physical VMEM; 32 MiB covers the 4 MiB
    # blocks we target, is safely below v7x's 64 MiB physical, and explicitly
    # raises v5e above its 16 MiB default scoped limit (physical 128 MiB).
    vmem_limit = min(32 << 20, vmem_cap // 2)
    target_block = max(1 << 20, vmem_limit // 8)  # 4 MiB at a 32 MiB limit
    return vmem_limit, target_block


# Tensors at or below this run as one whole-array block (single DMA in/out,
# zero per-step overhead).  Above it we always emit an even number of grid
# steps so a v7x megacore can split the HBM traffic across both TensorCores.
_SINGLE_BLOCK_BYTES = 2 << 20


def _scale_2d(scale_f32, x2d, *, target_block_bytes=None, single_block_bytes=None):
    """logit_scale * x for a lane-dense 2D slab (rows, lane) via pallas_call."""
    rows, lane = x2d.shape
    dtype = x2d.dtype
    itemsize = jnp.dtype(dtype).itemsize
    total_bytes = rows * lane * itemsize
    # Sublane packing multiple per dtype width (f32: 8, bf16: 16, int8/fp8: 32).
    pack = {4: 8, 2: 16, 1: 32}.get(itemsize, 8)

    vmem_limit, default_block = _vmem_budget()
    if target_block_bytes is None:
        target_block_bytes = default_block
    if single_block_bytes is None:
        single_block_bytes = _SINGLE_BLOCK_BYTES

    if total_bytes <= single_block_bytes or rows <= pack:
        # Small input: one whole-array block (full dims bypass the (8,128)
        # divisibility rule) -> single DMA in / out, no per-step grid overhead.
        tile_rows = rows
        grid = (1,)
    else:
        # Derive the tile from an EVEN step count near the per-generation
        # target block size so both v7x TensorCores get equal, lane-dense
        # blocks; any ragged trailing block is masked by Pallas on writeback.
        steps = max(2, _cdiv(total_bytes, target_block_bytes))
        if steps % 2:
            steps += 1
        tile_rows = min(rows, _round_up(_cdiv(rows, steps), pack))
        grid = (_cdiv(rows, tile_rows),)

    scale2d = scale_f32.reshape(1, 1)
    n = rows * lane

    return pl.pallas_call(
        _scale_kernel,
        out_shape=jax.ShapeDtypeStruct((rows, lane), dtype),
        grid_spec=pltpu.PrefetchScalarGridSpec(
            num_scalar_prefetch=0,
            grid=grid,
            in_specs=[
                pl.BlockSpec(memory_space=pltpu.SMEM),              # scalar param
                pl.BlockSpec((tile_rows, lane), lambda i: (i, 0)),  # x tile
            ],
            out_specs=pl.BlockSpec((tile_rows, lane), lambda i: (i, 0)),
        ),
        compiler_params=pltpu.CompilerParams(
            dimension_semantics=("parallel",),
            vmem_limit_bytes=vmem_limit),
        cost_estimate=pl.CostEstimate(
            flops=n, transcendentals=0, bytes_accessed=2 * n * itemsize),
    )(scale2d, x2d)


def _pick_lane(n):
    # Widest lane-dense last dim that divides n exactly (no padding / masking).
    for lane in (1024, 512, 256, 128):
        if n % lane == 0:
            return lane
    return None


def logit_scale_forward(logit_scale, x, *, target_block_bytes=None,
                        single_block_bytes=None):
    """Compute logit_scale * x with a Pallas TPU kernel.

    logit_scale: scalar parameter (shape [] or python float).
    x: floating-point tensor of arbitrary shape (f32 / bf16 / f16 / ...).
    """
    x = jnp.asarray(x)
    if not jnp.issubdtype(x.dtype, jnp.floating):
        raise TypeError(
            f"logit_scale_forward expects a floating-point x, got {x.dtype}")
    logit_scale = jnp.asarray(logit_scale, dtype=jnp.float32)

    orig_shape = x.shape
    dtype = x.dtype
    n = x.size
    if n == 0:
        return x

    x_flat = x.reshape(-1)
    lane = _pick_lane(n)

    if lane is not None:
        out2d = _scale_2d(logit_scale, x_flat.reshape(n // lane, lane),
                          target_block_bytes=target_block_bytes,
                          single_block_bytes=single_block_bytes)
        return out2d.reshape(orig_shape)

    # Ragged n (not a multiple of 128): run the 128-aligned prefix through the
    # kernel and the < 128-element tail as a plain jnp multiply, then stitch.
    # One concat pass instead of the old pad + slice (two full HBM passes).
    # TODO(synk): a masked last block driven by a scalar-prefetched valid
    # length would avoid the concat copy entirely.
    n_aligned = (n // 128) * 128
    tail = x_flat[n_aligned:]
    tail_out = (logit_scale * tail.astype(jnp.float32)).astype(dtype)
    if n_aligned == 0:
        return tail_out.reshape(orig_shape)
    head2d = _scale_2d(logit_scale, x_flat[:n_aligned].reshape(-1, 128),
                       target_block_bytes=target_block_bytes,
                       single_block_bytes=single_block_bytes)
    return jnp.concatenate([head2d.reshape(-1), tail_out]).reshape(orig_shape)


if __name__ == "__main__":
    key = jax.random.PRNGKey(0)
    # nn.Parameter(torch.ones([])) -> scalar initialized to 1.0
    logit_scale = jnp.ones([], dtype=jnp.float32)

    # Primary check: small NCHW input (single whole-array block path).
    x = jax.random.normal(key, (2, 4, 16, 16), dtype=jnp.float32)
    out = jax.block_until_ready(logit_scale_forward(logit_scale, x))
    assert out.shape == x.shape and out.dtype == x.dtype
    assert jnp.allclose(out, logit_scale * x, atol=1e-6), "f32 mismatch"

    # Multi-block path: shrink the block / single-block thresholds so a small
    # tensor exercises the even-step tiled grid that large tensors hit for real.
    k1, k2, k3 = jax.random.split(key, 3)
    scale2 = jnp.asarray(0.5, dtype=jnp.float32)
    x2 = jax.random.normal(k1, (4, 8, 32, 32), dtype=jnp.float32)  # 128 KiB
    out2 = jax.block_until_ready(
        logit_scale_forward(scale2, x2,
                            target_block_bytes=32 * 1024,
                            single_block_bytes=16 * 1024))
    assert jnp.allclose(out2, scale2 * x2, atol=1e-6), "tiled path mismatch"

    # bf16 with a NON-unit scale: kernel multiplies in f32, rounds once to bf16.
    scale3 = jnp.asarray(0.37, dtype=jnp.float32)
    x3 = jax.random.normal(k2, (2, 4, 16, 16)).astype(jnp.bfloat16)
    out3 = jax.block_until_ready(logit_scale_forward(scale3, x3))
    ref3 = (scale3 * x3.astype(jnp.float32)).astype(jnp.bfloat16)
    assert out3.dtype == jnp.bfloat16
    assert jnp.allclose(out3.astype(jnp.float32), ref3.astype(jnp.float32),
                        atol=1e-2), "bf16 mismatch"

    # Ragged size (n % 128 != 0): aligned prefix through the kernel + jnp tail.
    x4 = jax.random.normal(k3, (3, 7, 13), dtype=jnp.float32)  # 273 elements
    out4 = jax.block_until_ready(logit_scale_forward(scale2, x4))
    assert out4.shape == x4.shape
    assert jnp.allclose(out4, scale2 * x4, atol=1e-6), "ragged path mismatch"

    print("KERNEL_OK")
</pallas_src>

<mosaic_0001>
module attributes {stable_mosaic.version = 11 : i64} {
  func.func @_scale_kernel(%arg0: i32, %arg1: memref<1x1xf32, #tpu.memory_space<smem>>, %arg2: memref<2x1024xf32, #tpu.memory_space<vmem>>, %arg3: memref<2x1024xf32, #tpu.memory_space<vmem>>) attributes {dimension_semantics = [#tpu.dimension_semantics<parallel>], iteration_bounds = array<i64: 1>, scalar_prefetch = 0 : i64, scratch_operands = 0 : i64, tpu.core_type = #tpu.core_type<tc>, window_params = [{transform_indices = @transform_0, window_bounds = array<i64: 1, 1>}, {transform_indices = @transform_1, window_bounds = array<i64: 2, 1024>}, {transform_indices = @transform_2, window_bounds = array<i64: 2, 1024>}]} {
    %c0 = arith.constant 0 : index
    %c0_0 = arith.constant 0 : index
    %0 = memref.load %arg1[%c0, %c0_0] : memref<1x1xf32, #tpu.memory_space<smem>>
    %c0_1 = arith.constant 0 : index
    %c0_2 = arith.constant 0 : index
    %1 = vector.load %arg2[%c0_1, %c0_2] : memref<2x1024xf32, #tpu.memory_space<vmem>>, vector<2x1024xf32>
    %2 = vector.broadcast %0 : f32 to vector<2x1024xf32>
    %3 = arith.mulf %2, %1 : vector<2x1024xf32>
    %c0_3 = arith.constant 0 : index
    %c0_4 = arith.constant 0 : index
    %4 = vector.load %arg3[%c0_3, %c0_4] : memref<2x1024xf32, #tpu.memory_space<vmem>>, vector<2x1024xf32>
    tpu.vector_store %arg3[%c0_3, %c0_4], %3 {strides = array<i32>} : memref<2x1024xf32, #tpu.memory_space<vmem>>, vector<2x1024xf32>,
    return
  }
  func.func @transform_0(%arg0: i32) -> (i32, i32) {
    %c0_i32 = arith.constant 0 : i32
    %c0_i32_0 = arith.constant 0 : i32
    %c0_i32_1 = arith.constant 0 : i32
    return %c0_i32, %c0_i32_0 : i32, i32
  }
  func.func @transform_1(%arg0: i32) -> (i32, i32) {
    %c0_i32 = arith.constant 0 : i32
    %c0_i32_0 = arith.constant 0 : i32
    return %arg0, %c0_i32 : i32, i32
  }
  func.func @transform_2(%arg0: i32) -> (i32, i32) {
    %c0_i32 = arith.constant 0 : i32
    %c0_i32_0 = arith.constant 0 : i32
    return %arg0, %c0_i32 : i32, i32
  }
}

</mosaic_0001>

<llo_original>
// kernel: tpu_custom_call.1
$region0: #{tpu_custom_call.1}
  #allocation0 [shape = 'u32[]', space=smem, size = 0x4, offset = 0x4, fixed_abs, tag = 'smem constant byte address 0x4 - core index']
  #allocation1 [shape = 'u32[144,128]{1,0:T(1,128)}', space=vmem, size = 0x12000, scoped, tag = 'internal scratch']
  #allocation2 [shape = 'f32[1,1]{1,0:T(1,128)S(6)}', space=smem, size = 0x200, scoped, tag = 'scoped memory for tpu_custom_call.1']
  %s0 = inlined_call_operand.<no memory space> [shape: f32[1,1], index: 0, kind: input, shape index: {}]
  %s1 = inlined_call_operand.hbm [shape: f32[2,1024], index: 1, kind: input, shape index: {}]
  %s2 = inlined_call_operand.hbm [shape: f32[2,1024], index: 2, kind: output, shape index: {}]
  %s3 = sld [smem:[#allocation0]]
  $region22: #{tpu_custom_call.1} parent=0
    _
  %s5 = ssub.s32 1, %s3
  %s6 = scalar_select 0, %s5, %s3
  %7 = sst [smem:[#allocation2]] %s0
  $region1: #{tpu_custom_call.1} parent=0
    #allocation3 [shape = 'u8[8192]{0}', space=vmem, size = 0x2000, scoped, tag = 'input window, operand 1, single buffered']
    #allocation4 [shape = 's32[1]{0}', space=sflag, size = 0x4, scoped, tag = 'scoped memory for tpu_custom_call.1']
    #allocation5 [shape = 's32[1]{0}', space=sflag, size = 0x4, scoped, tag = 'scoped memory for tpu_custom_call.1']
    #allocation6 [shape = 'u8[8192]{0}', space=vmem, size = 0x2000, scoped, tag = 'output window, operand 0, single buffered']
    %8 = vsyncpa [#allocation4], 0
    %9 = vsyncpa [#allocation5], 0
    // Predicated region
    $region2: #{tpu_custom_call.1} parent=1 // pred_check
      _
    $region3: #{tpu_custom_call.1} parent=1 // pred_check_branch
      %11 = sbr.rel (0) target = $region5
    $region4: #{tpu_custom_call.1} parent=1 // pred_region
      _
    $region5: #{tpu_custom_call.1} parent=1 // pred_fallthru
      _
    // Predicated region
    $region6: #{tpu_custom_call.1} parent=1 // pred_check
      _
    $region7: #{tpu_custom_call.1} parent=1 // pred_check_branch
      %13 = sbr.rel (0) target = $region9
    $region8: #{tpu_custom_call.1} parent=1 // pred_region
      %s15 = ssub.s32 256, 256
      %16 = vsyncadd [#allocation4], %s15
      %s18 = sshll.u32 [#allocation3], 4
      %s19 = int_to_ptr.vmem [resolvable:$true] %s18
      %21 = dma.hbm_to_vmem [thread:$0]  %s1, 256, %s19, [#allocation4]
    $region9: #{tpu_custom_call.1} parent=1 // pred_fallthru
      _
    // Predicated region
    $region10: #{tpu_custom_call.1} parent=1 // pred_check
      _
    $region11: #{tpu_custom_call.1} parent=1 // pred_check_branch
      %23 = sbr.rel (0) target = $region13
    $region12: #{tpu_custom_call.1} parent=1 // pred_region
      %24 = dma.done [#allocation4], 256
    $region13: #{tpu_custom_call.1} parent=1 // pred_fallthru
      _
    %s25 = sld [smem:[#allocation2]]
    %v26 = vld [vmem:[#allocation3] sm:$0xff]
    %v27 = vld [vmem:[#allocation3 + $0x8] sm:$0xff]
    %v28 = vstv %s25
    %v29 = vmul.f32 %v28, %v26
    %v30 = vmul.f32 %v28, %v27
    %31 = vst [vmem:[#allocation6] sm:$0xff] %v29
    %32 = vst [vmem:[#allocation6 + $0x8] sm:$0xff] %v30
    // Predicated region
    $region14: #{tpu_custom_call.1} parent=1 // pred_check
      _
    $region15: #{tpu_custom_call.1} parent=1 // pred_check_branch
      %34 = sbr.rel (0) target = $region17
    $region16: #{tpu_custom_call.1} parent=1 // pred_region
      %s36 = ssub.s32 256, 256
      %37 = vsyncadd [#allocation5], %s36
      %s39 = sshll.u32 [#allocation6], 4
      %s40 = int_to_ptr.vmem [resolvable:$true] %s39
      %42 = dma.vmem_to_hbm [thread:$0]  %s40, 256, %s2, [#allocation5]
    $region17: #{tpu_custom_call.1} parent=1 // pred_fallthru
      _
    // Predicated region
    $region18: #{tpu_custom_call.1} parent=1 // pred_check
      _
    $region19: #{tpu_custom_call.1} parent=1 // pred_check_branch
      %44 = sbr.rel (0) target = $region21
    $region20: #{tpu_custom_call.1} parent=1 // pred_region
      %45 = dma.done [#allocation5], 256
    $region21: #{tpu_custom_call.1} parent=1 // pred_fallthru
      _
    %46 = vsyncpa [#allocation4], 1
    %47 = vsyncpa [#allocation5], 1

</llo_original>
